<compile_context>
chip_gen: v6e
topology: v6e:2x2x1
jax: 0.10.0
libtpu: 0.0.40
codegen_flags: <defaults>
</compile_context>

<pallas_src>
import functools

import jax
import jax.numpy as jnp
from jax import lax
from jax.experimental import pallas as pl
from jax.experimental.pallas import tpu as pltpu

EPS = 1e-8     # GroupNorm eps in the module
_PAD = 128     # halo region on each side of the H scratch (keeps tile stores lane-aligned)


def vad_kernel(x_ref, w1_ref, p_ref, out_ref, hH_ref, *, T, Tt, W):
    """Grid = (B, num_T_tiles); one (sample, T-tile) per step.

    x_ref  : (1, Cin, Tt)       native NCW input tile (no wrapper padding)
    w1_ref : (20, Cin)          conv1 taps concatenated: row 4*k + c = w1[c, :, k]
    p_ref  : (8, 8) f32         packed small params (see vad_forward)
    out_ref: (1, 1, W)          per-sample output block, resident across the T axis
    hH_ref : (20, W + 2*_PAD)   persistent scratch: H[:, c] lives at column _PAD + c,
                                zero halos on both sides emulate the conv zero padding.
    """
    t = pl.program_id(1)
    nt = pl.num_programs(1)

    # --- once per sample: zero the halo columns of the scratch ------------------
    @pl.when(t == 0)
    def _():
        hH_ref[:, 0:_PAD] = jnp.zeros((20, _PAD), jnp.float32)
        hH_ref[:, _PAD + W:2 * _PAD + W] = jnp.zeros((20, _PAD), jnp.float32)

    # --- per tile: ONE MXU matmul covering all 5 taps, aligned store ------------
    x = x_ref[0]                                                      # (Cin, Tt)
    H = jnp.dot(w1_ref[...], x, preferred_element_type=jnp.float32)   # (20, Tt)
    if W > T:
        # The last tile may extend past T (uninitialized lanes): zero them so they
        # behave exactly like the conv's zero padding / are excluded from GN stats.
        gcol = t * Tt + lax.broadcasted_iota(jnp.int32, (1, Tt), 1)
        H = jnp.where(gcol < T, H, 0.0)
    if Tt == W:                       # single-tile case: static store
        hH_ref[:, _PAD:_PAD + Tt] = H
    else:                             # tiled case: Tt is a multiple of 128
        toff = pl.multiple_of(t * Tt, 128)
        hH_ref[:, pl.ds(_PAD + toff, Tt)] = H

    # --- last tile of the sample: halo combine, PReLU, GN, conv2, sigmoid -------
    @pl.when(t == nt - 1)
    def _():
        b1v = p_ref[0:4, 0:1]          # conv1 bias                     (4, 1)
        bconst = p_ref[0:3, 1:2]       # sum_c w2[c,k] * beta[c]        (3, 1)
        alphav = p_ref[0:4, 2:3]       # PReLU slope (replicated)       (4, 1)
        w2g = p_ref[4:7, 0:4]          # w2[c,k] * gamma[c]             (3, 4)
        b2v = p_ref[7:8, 0:1]          # conv2 bias                     (1, 1)

        # conv1 halo: h[:, j] = b1 + sum_k H_k[:, j - 2 + k]
        # tap k lives at scratch rows 4k:4k+4, column (j - 2 + k) + _PAD.
        h = (b1v
             + hH_ref[0:4,   _PAD - 2:_PAD - 2 + W]
             + hH_ref[4:8,   _PAD - 1:_PAD - 1 + W]
             + hH_ref[8:12,  _PAD:_PAD + W]
             + hH_ref[12:16, _PAD + 1:_PAD + 1 + W]
             + hH_ref[16:20, _PAD + 2:_PAD + 2 + W])                   # (4, W)

        # PReLU (single shared slope)
        h = jnp.where(h >= 0.0, h, alphav * h)

        # GroupNorm(1, 4): stats over the valid (4, T) region only, fused
        # centered form (no E[x^2]-mean^2 cancellation).
        if W > T:
            lane = lax.broadcasted_iota(jnp.int32, (1, W), 1)
            valid = lane < T
            hs = jnp.where(valid, h, 0.0)
        else:
            hs = h
        inv_n = 1.0 / (4.0 * T)
        mean = jnp.sum(hs) * inv_n
        centered = h - mean
        c2 = centered * centered
        if W > T:
            c2 = jnp.where(valid, c2, 0.0)
        var = jnp.sum(c2) * inv_n
        nh = centered * lax.rsqrt(var + EPS)                           # (4, W)

        # conv2 (gamma folded into w2g, beta folded into per-tap constants that
        # only act at valid positions thanks to the zero halos).
        rb = jnp.dot(w2g, nh, preferred_element_type=jnp.float32) + bconst   # (3, W)
        if W > T:
            rb = jnp.where(valid, rb, 0.0)
        # Reuse the zero-haloed scratch rows 0:3 instead of a materialized concat.
        hH_ref[0:3, _PAD:_PAD + W] = rb
        y = (b2v
             + hH_ref[0:1, _PAD - 1:_PAD - 1 + W]
             + hH_ref[1:2, _PAD:_PAD + W]
             + hH_ref[2:3, _PAD + 1:_PAD + 1 + W])                     # (1, W)

        out_ref[0] = jax.nn.sigmoid(y).astype(out_ref.dtype)


def _plan_t_tiles(T, max_tile):
    """Pick a lane-aligned T tile so the grid streams the input in chunks."""
    if T <= max_tile:
        return T, 1                            # single tile covering the whole T
    nt = -(-T // max_tile)
    Tt = 128 * (-(-T // (128 * nt)))           # smallest 128-multiple tile for nt tiles
    nt = -(-T // Tt)
    return Tt, nt


def vad_forward(x_nct, params, *, compute_dtype=jnp.float32, t_tile=512):
    """x_nct: (B, Cin=257, T) in PyTorch NCW layout.  Returns (B, 1, T) float32."""
    B, Cin, T = x_nct.shape
    COUT1, K1 = 4, 5
    p = params

    Tt, nt = _plan_t_tiles(T, t_tile)
    W = Tt * nt                                # lane extent of scratch / output block

    # --- tiny parameter packing (nothing touches the big tensor in the wrapper) ---
    # conv1 taps concatenated along rows: row 4*k + c holds w1[c, :, k]
    w1cat = jnp.transpose(p["w1"], (2, 0, 1)).reshape(K1 * COUT1, Cin)
    w1cat = w1cat.astype(compute_dtype)

    gamma, beta = p["gamma"], p["beta"]
    w2 = p["w2"][0]                                     # (4, 3) = (c, k)
    w2g = jnp.transpose(w2, (1, 0)) * gamma[None, :]    # (3, 4): w2[c,k] * gamma[c]
    bconst = jnp.sum(w2 * beta[:, None], axis=0)        # (3,):  sum_c w2[c,k] * beta[c]

    P = jnp.zeros((8, 8), jnp.float32)
    P = P.at[0:4, 0].set(p["b1"].astype(jnp.float32))
    P = P.at[0:3, 1].set(bconst.astype(jnp.float32))
    P = P.at[0:4, 2].set(jnp.broadcast_to(p["alpha"], (4,)).astype(jnp.float32))
    P = P.at[4:7, 0:4].set(w2g.astype(jnp.float32))
    P = P.at[7, 0].set(p["b2"][0].astype(jnp.float32))

    x_in = x_nct.astype(compute_dtype)
    isz = jnp.dtype(compute_dtype).itemsize

    # --- explicit VMEM budget ---------------------------------------------------
    r8 = lambda n: -(-n // 8) * 8
    r128 = lambda n: -(-n // 128) * 128
    est = (2 * r8(Cin) * r128(Tt) * isz                   # x tile, double buffered
           + 2 * r8(K1 * COUT1) * r128(Cin) * isz         # conv1 weight block
           + 2 * 8 * r128(W) * 4                          # resident output block
           + r8(K1 * COUT1) * r128(W + 2 * _PAD) * 4      # H scratch
           + 12 * 8 * r128(W) * 4                         # finalize temporaries headroom
           + (1 << 20))
    vmem_limit = int(min(max(3 * est, 16 << 20), 64 << 20))

    cost = pl.CostEstimate(
        flops=2 * B * T * (K1 * COUT1 * Cin + 3 * COUT1) + 8 * B * T,
        transcendentals=B * T,
        bytes_accessed=B * Cin * T * isz + B * W * 4 + (K1 * COUT1 * Cin + 64) * isz,
    )

    kern = functools.partial(vad_kernel, T=T, Tt=Tt, W=W)

    out = pl.pallas_call(
        kern,
        out_shape=jax.ShapeDtypeStruct((B, 1, W), jnp.float32),
        grid_spec=pltpu.PrefetchScalarGridSpec(
            num_scalar_prefetch=0,
            grid=(B, nt),
            in_specs=[
                pl.BlockSpec((1, Cin, Tt), lambda b, t: (b, 0, t)),
                pl.BlockSpec((K1 * COUT1, Cin), lambda b, t: (0, 0)),
                pl.BlockSpec((8, 8), lambda b, t: (0, 0)),
            ],
            out_specs=pl.BlockSpec((1, 1, W), lambda b, t: (b, 0, 0)),
            scratch_shapes=[pltpu.VMEM((K1 * COUT1, W + 2 * _PAD), jnp.float32)],
        ),
        compiler_params=pltpu.CompilerParams(
            dimension_semantics=("parallel", "arbitrary"),
            vmem_limit_bytes=vmem_limit),
        cost_estimate=cost,
    )(x_in, w1cat, P)

    return out if W == T else out[:, :, :T]


def init_params(key, fft_num=257):
    """Deterministic parameter init mirroring the module's shapes.

    weight_norm(w) => effective weight w = g * v / ||v||, norm over (Cin, K)
    per output channel, with g initialized to ||v|| (PyTorch wn default).
    """
    k = jax.random.split(key, 6)

    v1 = 0.1 * jax.random.normal(k[0], (4, fft_num, 5), jnp.float32)
    n1 = jnp.sqrt(jnp.sum(v1 * v1, axis=(1, 2), keepdims=True))
    g1 = n1[:, 0, 0]
    w1 = g1[:, None, None] * v1 / n1
    b1 = 0.1 * jax.random.normal(k[1], (4,), jnp.float32)

    v2 = 0.1 * jax.random.normal(k[2], (1, 4, 3), jnp.float32)
    n2 = jnp.sqrt(jnp.sum(v2 * v2, axis=(1, 2), keepdims=True))
    g2 = n2[:, 0, 0]
    w2 = g2[:, None, None] * v2 / n2
    b2 = 0.1 * jax.random.normal(k[3], (1,), jnp.float32)

    alpha = jnp.array(0.25, jnp.float32)                # PReLU default
    gamma = 1.0 + 0.1 * jax.random.normal(k[4], (4,), jnp.float32)
    beta = 0.1 * jax.random.normal(k[5], (4,), jnp.float32)

    return dict(w1=w1, b1=b1, alpha=alpha, gamma=gamma, beta=beta,
                w2=w2, b2=b2)


def ref_forward(x, p):
    """Pure-JAX (XLA) reference of the PyTorch forward, NCW layout."""
    def conv1d(x, w, b, pad):
        y = lax.conv_general_dilated(x, w, (1,), [(pad, pad)],
                                     dimension_numbers=('NCH', 'OIH', 'NCH'))
        return y + b[None, :, None]

    h = conv1d(x, p["w1"], p["b1"], 2)
    h = jnp.where(h >= 0, h, p["alpha"] * h)                   # PReLU
    mean = jnp.mean(h, axis=(1, 2), keepdims=True)             # GroupNorm(1, 4)
    var = jnp.mean((h - mean) ** 2, axis=(1, 2), keepdims=True)
    h = (h - mean) / jnp.sqrt(var + EPS)
    h = h * p["gamma"][None, :, None] + p["beta"][None, :, None]
    y = conv1d(h, p["w2"], p["b2"], 1)
    return jax.nn.sigmoid(y)


if __name__ == "__main__":
    FFT_NUM = 257
    key = jax.random.PRNGKey(0)
    kp, kx1, kx2 = jax.random.split(key, 3)
    params = init_params(kp, fft_num=FFT_NUM)

    # Case 1: small shape from the task spec (single T tile).
    x1 = jax.random.normal(kx1, (2, FFT_NUM, 16), jnp.float32)
    out1 = jax.block_until_ready(vad_forward(x1, params))
    ref1 = jax.block_until_ready(ref_forward(x1, params))
    assert out1.shape == (2, 1, 16), out1.shape
    err1 = float(jnp.max(jnp.abs(out1 - ref1)))
    assert err1 < 3e-5, f"f32 small-T max abs err {err1}"

    # Case 2: longer, non-128-aligned T exercising the T-tiled streaming path
    # (grid = (B, nt) with nt > 1, masked ragged last tile).
    x2 = jax.random.normal(kx2, (2, FFT_NUM, 700), jnp.float32)
    out2 = jax.block_until_ready(vad_forward(x2, params))
    ref2 = jax.block_until_ready(ref_forward(x2, params))
    assert out2.shape == (2, 1, 700), out2.shape
    err2 = float(jnp.max(jnp.abs(out2 - ref2)))
    assert err2 < 3e-5, f"f32 tiled-T max abs err {err2}"

    # Case 3: bf16 input/weight path (halves HBM traffic on the dominant read;
    # recommended default on v5e).  Loose tolerance since inputs are quantized.
    out3 = jax.block_until_ready(vad_forward(x2, params, compute_dtype=jnp.bfloat16))
    err3 = float(jnp.max(jnp.abs(out3 - ref2)))
    assert err3 < 5e-2, f"bf16 max abs err {err3}"

    print("KERNEL_OK")
</pallas_src>

<mosaic_0001>
module attributes {stable_mosaic.version = 11 : i64} {
  func.func @vad_kernel(%arg0: i32, %arg1: i32, %arg2: memref<1x257x16xf32, #tpu.memory_space<vmem>>, %arg3: memref<20x257xf32, #tpu.memory_space<vmem>>, %arg4: memref<8x8xf32, #tpu.memory_space<vmem>>, %arg5: memref<1x1x16xf32, #tpu.memory_space<vmem>>, %arg6: memref<20x272xf32, #tpu.memory_space<vmem>>) attributes {dimension_semantics = [#tpu.dimension_semantics<parallel>, #tpu.dimension_semantics<arbitrary>], iteration_bounds = array<i64: 2, 1>, scalar_prefetch = 0 : i64, scratch_operands = 1 : i64, tpu.core_type = #tpu.core_type<tc>, window_params = [{transform_indices = @transform_0, window_bounds = array<i64: 1, 257, 16>}, {pipeline_mode = #tpu.pipeline_mode<synchronous>, transform_indices = @transform_1, window_bounds = array<i64: 20, 257>}, {pipeline_mode = #tpu.pipeline_mode<synchronous>, transform_indices = @transform_2, window_bounds = array<i64: 8, 8>}, {transform_indices = @transform_3, window_bounds = array<i64: 1, 1, 16>}]} {
    %c0_i32 = arith.constant 0 : i32
    %0 = arith.cmpi eq, %arg1, %c0_i32 : i32
    %1 = arith.extui %0 : i1 to i32
    %c0_i32_0 = arith.constant 0 : i32
    %2 = arith.cmpi ne, %1, %c0_i32_0 : i32
    scf.if %2 {
      %cst_8 = arith.constant 0.000000e+00 : f32
      %11 = vector.broadcast %cst_8 : f32 to vector<20x128xf32>
      %c0_9 = arith.constant 0 : index
      %c0_10 = arith.constant 0 : index
      %12 = vector.load %arg6[%c0_9, %c0_10] : memref<20x272xf32, #tpu.memory_space<vmem>>, vector<20x128xf32>
      tpu.vector_store %arg6[%c0_9, %c0_10], %11 {strides = array<i32>} : memref<20x272xf32, #tpu.memory_space<vmem>>, vector<20x128xf32>,
      %cst_11 = arith.constant 0.000000e+00 : f32
      %13 = vector.broadcast %cst_11 : f32 to vector<20x128xf32>
      %c0_12 = arith.constant 0 : index
      %c144 = arith.constant 144 : index
      %14 = vector.load %arg6[%c0_12, %c144] : memref<20x272xf32, #tpu.memory_space<vmem>>, vector<20x128xf32>
      tpu.vector_store %arg6[%c0_12, %c144], %13 {strides = array<i32>} : memref<20x272xf32, #tpu.memory_space<vmem>>, vector<20x128xf32>,
    } else {
    }
    %c0 = arith.constant 0 : index
    %c0_1 = arith.constant 0 : index
    %c0_2 = arith.constant 0 : index
    %3 = vector.load %arg2[%c0, %c0_1, %c0_2] : memref<1x257x16xf32, #tpu.memory_space<vmem>>, vector<1x257x16xf32>
    %4 = vector.shape_cast %3 : vector<1x257x16xf32> to vector<257x16xf32>
    %c0_3 = arith.constant 0 : index
    %c0_4 = arith.constant 0 : index
    %5 = vector.load %arg3[%c0_3, %c0_4] : memref<20x257xf32, #tpu.memory_space<vmem>>, vector<20x257xf32>
    %cst = arith.constant dense<0.000000e+00> : vector<20x16xf32>
    %6 = tpu.matmul %5, %4, %cst {dimension_numbers = #tpu.dot_dimension_numbers<[1], [0], [0], [1], [0, 0, 1, 1], [], []>} : vector<20x257xf32>, vector<257x16xf32>, vector<20x16xf32> -> vector<20x16xf32>
    %c0_5 = arith.constant 0 : index
    %c128 = arith.constant 128 : index
    %7 = vector.load %arg6[%c0_5, %c128] : memref<20x272xf32, #tpu.memory_space<vmem>>, vector<20x16xf32>
    tpu.vector_store %arg6[%c0_5, %c128], %6 {strides = array<i32>} : memref<20x272xf32, #tpu.memory_space<vmem>>, vector<20x16xf32>,
    %c0_i32_6 = arith.constant 0 : i32
    %8 = arith.cmpi eq, %arg1, %c0_i32_6 : i32
    %9 = arith.extui %8 : i1 to i32
    %c0_i32_7 = arith.constant 0 : i32
    %10 = arith.cmpi ne, %9, %c0_i32_7 : i32
    scf.if %10 {
      %c0_8 = arith.constant 0 : index
      %c0_9 = arith.constant 0 : index
      %11 = vector.load %arg4[%c0_8, %c0_9] : memref<8x8xf32, #tpu.memory_space<vmem>>, vector<4x1xf32>
      %c0_10 = arith.constant 0 : index
      %c1 = arith.constant 1 : index
      %12 = vector.load %arg4[%c0_10, %c1] : memref<8x8xf32, #tpu.memory_space<vmem>>, vector<3x1xf32>
      %c0_11 = arith.constant 0 : index
      %c2 = arith.constant 2 : index
      %13 = vector.load %arg4[%c0_11, %c2] : memref<8x8xf32, #tpu.memory_space<vmem>>, vector<4x1xf32>
      %c4 = arith.constant 4 : index
      %c0_12 = arith.constant 0 : index
      %14 = vector.load %arg4[%c4, %c0_12] : memref<8x8xf32, #tpu.memory_space<vmem>>, vector<3x4xf32>
      %c7 = arith.constant 7 : index
      %c0_13 = arith.constant 0 : index
      %15 = vector.load %arg4[%c7, %c0_13] : memref<8x8xf32, #tpu.memory_space<vmem>>, vector<1x1xf32>
      %c0_14 = arith.constant 0 : index
      %c126 = arith.constant 126 : index
      %16 = vector.load %arg6[%c0_14, %c126] : memref<20x272xf32, #tpu.memory_space<vmem>>, vector<4x16xf32>
      %17 = vector.broadcast %11 : vector<4x1xf32> to vector<4x16xf32>
      %18 = arith.addf %17, %16 : vector<4x16xf32>
      %c4_15 = arith.constant 4 : index
      %c127 = arith.constant 127 : index
      %19 = vector.load %arg6[%c4_15, %c127] : memref<20x272xf32, #tpu.memory_space<vmem>>, vector<4x16xf32>
      %20 = arith.addf %18, %19 : vector<4x16xf32>
      %c8 = arith.constant 8 : index
      %c128_16 = arith.constant 128 : index
      %21 = vector.load %arg6[%c8, %c128_16] : memref<20x272xf32, #tpu.memory_space<vmem>>, vector<4x16xf32>
      %22 = arith.addf %20, %21 : vector<4x16xf32>
      %c12 = arith.constant 12 : index
      %c129 = arith.constant 129 : index
      %23 = vector.load %arg6[%c12, %c129] : memref<20x272xf32, #tpu.memory_space<vmem>>, vector<4x16xf32>
      %24 = arith.addf %22, %23 : vector<4x16xf32>
      %c16 = arith.constant 16 : index
      %c130 = arith.constant 130 : index
      %25 = vector.load %arg6[%c16, %c130] : memref<20x272xf32, #tpu.memory_space<vmem>>, vector<4x16xf32>
      %26 = arith.addf %24, %25 : vector<4x16xf32>
      %cst_17 = arith.constant 0.000000e+00 : f32
      %27 = vector.broadcast %cst_17 : f32 to vector<4x16xf32>
      %28 = arith.cmpf oge, %26, %27 : vector<4x16xf32>
      %29 = vector.broadcast %13 : vector<4x1xf32> to vector<4x16xf32>
      %30 = arith.mulf %29, %26 : vector<4x16xf32>
      %31 = arith.select %28, %26, %30 : vector<4x16xi1>, vector<4x16xf32>
      %32 = vector.shape_cast %31 : vector<4x16xf32> to vector<1x4x16xf32>
      %cst_18 = arith.constant dense<0.000000e+00> : vector<1xf32>
      %33 = vector.multi_reduction <add>, %32, %cst_18 [1, 2] : vector<1x4x16xf32> to vector<1xf32>
      %34 = vector.shape_cast %33 : vector<1xf32> to vector<1x1x1xf32>
      %35 = vector.extract %34[0, 0, 0] : f32 from vector<1x1x1xf32>
      %cst_19 = arith.constant 1.562500e-02 : f32
      %36 = arith.mulf %35, %cst_19 : f32
      %37 = vector.broadcast %36 : f32 to vector<4x16xf32>
      %38 = arith.subf %31, %37 : vector<4x16xf32>
      %39 = arith.mulf %38, %38 : vector<4x16xf32>
      %40 = vector.shape_cast %39 : vector<4x16xf32> to vector<1x4x16xf32>
      %cst_20 = arith.constant dense<0.000000e+00> : vector<1xf32>
      %41 = vector.multi_reduction <add>, %40, %cst_20 [1, 2] : vector<1x4x16xf32> to vector<1xf32>
      %42 = vector.shape_cast %41 : vector<1xf32> to vector<1x1x1xf32>
      %43 = vector.extract %42[0, 0, 0] : f32 from vector<1x1x1xf32>
      %cst_21 = arith.constant 1.562500e-02 : f32
      %44 = arith.mulf %43, %cst_21 : f32
      %cst_22 = arith.constant 9.99999993E-9 : f32
      %45 = arith.addf %44, %cst_22 : f32
      %46 = math.rsqrt %45 : f32
      %47 = vector.broadcast %46 : f32 to vector<4x16xf32>
      %48 = arith.mulf %38, %47 : vector<4x16xf32>
      %cst_23 = arith.constant dense<0.000000e+00> : vector<3x16xf32>
      %49 = tpu.matmul %14, %48, %cst_23 {dimension_numbers = #tpu.dot_dimension_numbers<[1], [0], [0], [1], [0, 0, 1, 1], [], []>} : vector<3x4xf32>, vector<4x16xf32>, vector<3x16xf32> -> vector<3x16xf32>
      %50 = vector.broadcast %12 : vector<3x1xf32> to vector<3x16xf32>
      %51 = arith.addf %49, %50 : vector<3x16xf32>
      %c0_24 = arith.constant 0 : index
      %c128_25 = arith.constant 128 : index
      %52 = vector.load %arg6[%c0_24, %c128_25] : memref<20x272xf32, #tpu.memory_space<vmem>>, vector<3x16xf32>
      tpu.vector_store %arg6[%c0_24, %c128_25], %51 {strides = array<i32>} : memref<20x272xf32, #tpu.memory_space<vmem>>, vector<3x16xf32>,
      %c0_26 = arith.constant 0 : index
      %c127_27 = arith.constant 127 : index
      %53 = vector.load %arg6[%c0_26, %c127_27] : memref<20x272xf32, #tpu.memory_space<vmem>>, vector<1x16xf32>
      %54 = vector.broadcast %15 : vector<1x1xf32> to vector<1x16xf32>
      %55 = arith.addf %54, %53 : vector<1x16xf32>
      %c1_28 = arith.constant 1 : index
      %c128_29 = arith.constant 128 : index
      %56 = vector.load %arg6[%c1_28, %c128_29] : memref<20x272xf32, #tpu.memory_space<vmem>>, vector<1x16xf32>
      %57 = arith.addf %55, %56 : vector<1x16xf32>
      %c2_30 = arith.constant 2 : index
      %c129_31 = arith.constant 129 : index
      %58 = vector.load %arg6[%c2_30, %c129_31] : memref<20x272xf32, #tpu.memory_space<vmem>>, vector<1x16xf32>
      %59 = arith.addf %57, %58 : vector<1x16xf32>
      %60 = arith.negf %59 : vector<1x16xf32>
      %61 = math.exp %60 : vector<1x16xf32>
      %cst_32 = arith.constant 1.000000e+00 : f32
      %62 = vector.broadcast %cst_32 : f32 to vector<1x16xf32>
      %63 = arith.addf %62, %61 : vector<1x16xf32>
      %64 = arith.divf %62, %63 : vector<1x16xf32>
      %c0_33 = arith.constant 0 : index
      %c0_34 = arith.constant 0 : index
      %c0_35 = arith.constant 0 : index
      %65 = vector.load %arg5[%c0_33, %c0_34, %c0_35] : memref<1x1x16xf32, #tpu.memory_space<vmem>>, vector<1x1x16xf32>
      %66 = vector.shape_cast %65 : vector<1x1x16xf32> to vector<1x16xf32>
      %67 = vector.shape_cast %64 : vector<1x16xf32> to vector<1x1x16xf32>
      tpu.vector_store %arg5[%c0_33, %c0_34, %c0_35], %67 {strides = array<i32>} : memref<1x1x16xf32, #tpu.memory_space<vmem>>, vector<1x1x16xf32>,
    } else {
    }
    return
  }
  func.func @transform_0(%arg0: i32, %arg1: i32) -> (i32, i32, i32) {
    %c0_i32 = arith.constant 0 : i32
    %c0_i32_0 = arith.constant 0 : i32
    return %arg0, %c0_i32, %arg1 : i32, i32, i32
  }
  func.func @transform_1(%arg0: i32, %arg1: i32) -> (i32, i32) {
    %c0_i32 = arith.constant 0 : i32
    %c0_i32_0 = arith.constant 0 : i32
    %c0_i32_1 = arith.constant 0 : i32
    return %c0_i32, %c0_i32_0 : i32, i32
  }
  func.func @transform_2(%arg0: i32, %arg1: i32) -> (i32, i32) {
    %c0_i32 = arith.constant 0 : i32
    %c0_i32_0 = arith.constant 0 : i32
    %c0_i32_1 = arith.constant 0 : i32
    return %c0_i32, %c0_i32_0 : i32, i32
  }
  func.func @transform_3(%arg0: i32, %arg1: i32) -> (i32, i32, i32) {
    %c0_i32 = arith.constant 0 : i32
    %c0_i32_0 = arith.constant 0 : i32
    %c0_i32_1 = arith.constant 0 : i32
    return %arg0, %c0_i32, %c0_i32_0 : i32, i32, i32
  }
}

</mosaic_0001>

<llo_original>
// kernel: tpu_custom_call.1
$region0: #{tpu_custom_call.1}
  #allocation0 [shape = 'u32[]', space=smem, size = 0x4, offset = 0x4, fixed_abs, tag = 'smem constant byte address 0x4 - core index']
  #allocation1 [shape = 'u32[144,128]{1,0:T(1,128)}', space=vmem, size = 0x12000, scoped, tag = 'internal scratch']
  #allocation2 [shape = 'f32[20,272]{1,0:T(8,128)}', space=vmem, size = 0x9000, scoped, tag = 'scratch operand']
  %s0 = inlined_call_operand.vmem [shape: f32[2,257,16], index: 0, kind: input, shape index: {}]
  %s1 = inlined_call_operand.vmem [shape: f32[20,257], index: 1, kind: input, shape index: {}]
  %s2 = inlined_call_operand.vmem [shape: f32[8,8], index: 2, kind: input, shape index: {}]
  %s3 = inlined_call_operand.hbm [shape: f32[2,1,16], index: 3, kind: output, shape index: {}]
  %s4 = sld [smem:[#allocation0]]
  $region53: #{tpu_custom_call.1} parent=0
    _
  %s6 = ssub.s32 1, %s4
  %s7 = scalar_select 0, %s6, %s4
  $region1: #{tpu_custom_call.1} parent=0
    #allocation3 [shape = 'u8[1024]{0}', space=vmem, size = 0x400, scoped, tag = 'output window, operand 0']
    #allocation4 [shape = 's32[2]{0}', space=sflag, size = 0x8, scoped, tag = 'scoped memory for tpu_custom_call.1']
    %8 = vsyncpa [#allocation4], 0
    %s9 = scalar_lea.sflag [#allocation4], 1
    %10 = vsyncpa %s9, 0
    loop: start=0, step=1, limit=4
    $region2: #{tpu_custom_call.1} parent=1 // loop_pre_header
      _
    $region3: #{tpu_custom_call.1} parent=1 // loop_header
      %s12 = sphi 0, %s16
      %p13 = scmp.ge.s32.totalorder %s12, 4
      %s19 = sphi 0, %s31
      %s20 = sphi 0, %s27
      %s21 = sphi 0, %s19
      %s22 = sphi 0, %s20
      %s23 = sphi 0, %s21
      %s24 = sphi 0, %s22
      %s36 = sphi 0, %s38
      %s39 = sphi 0, %s36
      %s40 = sphi 0, %s39
      %s56 = sphi 0, %s40
      %s60 = sphi 0, %s60
      %s62 = sphi 0, %s60
      %s63 = sphi 0, %s62
      %s77 = sphi 0, %s63
      %s81 = sphi 0, %s81
      %s83 = sphi 0, %s81
      %s84 = sphi 0, %s83
      %s98 = sphi 0, %s84
      %s104 = sphi 0, %s106
      %s107 = sphi 0, %s104
      %s108 = sphi 0, %s107
      %s124 = sphi 0, %s108
    $region4: #{tpu_custom_call.1} parent=1 // loop_header_branch
      %15 = sbr.rel (%p13) target = $region8
    $region5: #{tpu_custom_call.1} parent=1 // loop_body
      %s17 = ssub.s32 %s12, 1
      %s18 = ssub.s32 %s12, 2
      %s25 = sadd.s32 1, %s20
      %p26 = scmp.ge.s32.totalorder %s25, 1
      %s27 = scalar_select %p26, 0, %s25
      %s28 = sadd.s32 1, %s19
      %s29 = scalar_select %p26, %s28, %s19
      %p30 = scmp.ge.s32.totalorder %s29, 2
      %s31 = scalar_select %p30, 0, %s29
      %s32 = ssub.s32 %s19, %s31
      %s33 = ssub.s32 %s20, %s27
      %s34 = sor.u32 %s32, %s33
      %p35 = scmp.eq.s32.totalorder %s34, 0
      %s37 = sadd.s32 %s36, 1
      %s38 = scalar_select %p35, %s36, %s37
      %p41 = pneg %p35
      %p42 = scmp.eq.s32.totalorder %s12, 1
      %p43 = por %p41, %p42
      %p44 = scmp.ne.s32.totalorder %s36, %s39
      %p45 = scmp.eq.s32.totalorder %s12, 0
      %p46 = por %p44, %p45
      %p47 = scmp.ne.s32.totalorder %s36, %s39
      %p48 = scmp.eq.s32.totalorder %s17, 1
      %p49 = por %p47, %p48
      %p50 = scmp.ne.s32.totalorder %s39, %s40
      %p51 = scmp.eq.s32.totalorder %s17, 0
      %p52 = por %p50, %p51
      %p53 = scmp.ne.s32.totalorder %s39, %s40
      %p54 = scmp.eq.s32.totalorder %s18, 1
      %p55 = por %p53, %p54
      %p57 = scmp.ne.s32.totalorder %s40, %s56
      %p58 = scmp.eq.s32.totalorder %s18, 0
      %p59 = por %p57, %p58
      %s61 = sadd.s32 %s60, 1
      %p64 = scmp.eq.s32.totalorder %s12, 1
      %p65 = scmp.ne.s32.totalorder %s60, %s62
      %p66 = scmp.eq.s32.totalorder %s12, 0
      %p67 = por %p65, %p66
      %p68 = scmp.ne.s32.totalorder %s60, %s62
      %p69 = scmp.eq.s32.totalorder %s17, 1
      %p70 = por %p68, %p69
      %p71 = scmp.ne.s32.totalorder %s62, %s63
      %p72 = scmp.eq.s32.totalorder %s17, 0
      %p73 = por %p71, %p72
      %p74 = scmp.ne.s32.totalorder %s62, %s63
      %p75 = scmp.eq.s32.totalorder %s18, 1
      %p76 = por %p74, %p75
      %p78 = scmp.ne.s32.totalorder %s63, %s77
      %p79 = scmp.eq.s32.totalorder %s18, 0
      %p80 = por %p78, %p79
      %s82 = sadd.s32 %s81, 1
      %p85 = scmp.eq.s32.totalorder %s12, 1
      %p86 = scmp.ne.s32.totalorder %s81, %s83
      %p87 = scmp.eq.s32.totalorder %s12, 0
      %p88 = por %p86, %p87
      %p89 = scmp.ne.s32.totalorder %s81, %s83
      %p90 = scmp.eq.s32.totalorder %s17, 1
      %p91 = por %p89, %p90
      %p92 = scmp.ne.s32.totalorder %s83, %s84
      %p93 = scmp.eq.s32.totalorder %s17, 0
      %p94 = por %p92, %p93
      %p95 = scmp.ne.s32.totalorder %s83, %s84
      %p96 = scmp.eq.s32.totalorder %s18, 1
      %p97 = por %p95, %p96
      %p99 = scmp.ne.s32.totalorder %s84, %s98
      %p100 = scmp.eq.s32.totalorder %s18, 0
      %p101 = por %p99, %p100
      %s102 = ssub.s32 %s19, %s31
      %p103 = scmp.eq.s32.totalorder %s102, 0
      %s105 = sadd.s32 %s104, 1
      %s106 = scalar_select %p103, %s104, %s105
      %p109 = pneg %p103
      %p110 = scmp.eq.s32.totalorder %s12, 1
      %p111 = por %p109, %p110
      %p112 = scmp.ne.s32.totalorder %s104, %s107
      %p113 = scmp.eq.s32.totalorder %s12, 0
      %p114 = por %p112, %p113
      %p115 = scmp.ne.s32.totalorder %s104, %s107
      %p116 = scmp.eq.s32.totalorder %s17, 1
      %p117 = por %p115, %p116
      %p118 = scmp.ne.s32.totalorder %s107, %s108
      %p119 = scmp.eq.s32.totalorder %s17, 0
      %p120 = por %p118, %p119
      %p121 = scmp.ne.s32.totalorder %s107, %s108
      %p122 = scmp.eq.s32.totalorder %s18, 1
      %p123 = por %p121, %p122
      %p125 = scmp.ne.s32.totalorder %s108, %s124
      %p126 = scmp.eq.s32.totalorder %s18, 0
      %p127 = por %p125, %p126
      %p128 = scmp.le.s32.totalorder 1, %s12
      %p129 = scmp.lt.s32.totalorder %s12, 3
      %p130 = pnand %p128, %p129
      %p131 = pneg %p130
      // Predicated region
      $region9: #{tpu_custom_call.1} parent=5 // pred_check
        _
      $region10: #{tpu_custom_call.1} parent=5 // pred_check_branch
        %133 = sbr.rel (%p130) target = $region12
      $region11: #{tpu_custom_call.1} parent=5 // pred_region
        %s134 = ssub.s32 %s12, 1
        // Predicated region
        $region13: #{tpu_custom_call.1} parent=11 // pred_check
          %p135 = pneg %p73
        $region14: #{tpu_custom_call.1} parent=11 // pred_check_branch
          %137 = sbr.rel (%p135) target = $region16
        $region15: #{tpu_custom_call.1} parent=11 // pred_region
          _
        $region16: #{tpu_custom_call.1} parent=11 // pred_fallthru
          _
        // Predicated region
        $region17: #{tpu_custom_call.1} parent=11 // pred_check
          %p138 = pneg %p94
        $region18: #{tpu_custom_call.1} parent=11 // pred_check_branch
          %140 = sbr.rel (%p138) target = $region20
        $region19: #{tpu_custom_call.1} parent=11 // pred_region
          _
        $region20: #{tpu_custom_call.1} parent=11 // pred_fallthru
          _
      $region12: #{tpu_custom_call.1} parent=5 // pred_fallthru
        _
      %p141 = scmp.lt.s32.totalorder %s12, 2
      // Predicated region
      $region21: #{tpu_custom_call.1} parent=5 // pred_check
        %p142 = pneg %p141
      $region22: #{tpu_custom_call.1} parent=5 // pred_check_branch
        %144 = sbr.rel (%p142) target = $region24
      $region23: #{tpu_custom_call.1} parent=5 // pred_region
        // Predicated region
        $region25: #{tpu_custom_call.1} parent=23 // pred_check
          %p145 = pneg %p46
        $region26: #{tpu_custom_call.1} parent=23 // pred_check_branch
          %147 = sbr.rel (%p145) target = $region28
        $region27: #{tpu_custom_call.1} parent=23 // pred_region
          %p148 = scmp.lt.s32.totalorder %s19, 1
          %s149 = scalar_select %p148, %s19, 1
          %p150 = scmp.lt.s32.totalorder %s20, 0
          %s151 = scalar_select %p150, %s20, 0
          %s152 = smul.addr %s149, 33
          %s153 = sadd.s32 %s151, %s152
          %s154 = smul.addr %s153, 8
          %s155 = scalar_lea.vmem %s0, %s154
        $region28: #{tpu_custom_call.1} parent=23 // pred_fallthru
          _
      $region24: #{tpu_custom_call.1} parent=5 // pred_fallthru
        _
      %p156 = scmp.le.s32.totalorder 1, %s12
      %p157 = scmp.lt.s32.totalorder %s12, 3
      %p158 = pnand %p156, %p157
      %p159 = pneg %p158
      // Predicated region
      $region29: #{tpu_custom_call.1} parent=5 // pred_check
        _
      $region30: #{tpu_custom_call.1} parent=5 // pred_check_branch
        %161 = sbr.rel (%p158) target = $region32
      $region31: #{tpu_custom_call.1} parent=5 // pred_region
        %s162 = ssub.s32 %s12, 1
        %p163 = scmp.lt.s32.totalorder %s21, 1
        %s164 = scalar_select %p163, %s21, 1
        %p165 = scmp.lt.s32.totalorder %s22, 0
        %s166 = scalar_select %p165, %s22, 0
        %s167 = smul.addr %s164, 33
        %s168 = sadd.s32 %s166, %s167
        %s169 = smul.addr %s168, 8
        %s170 = scalar_lea.vmem %s0, %s169
        %p171 = pneg %p52
        %p172 = pneg %p49
        %p173 = pneg %p73
        %p174 = pneg %p70
        %p175 = pneg %p94
        %p176 = pneg %p91
        %p177 = pneg %p120
        %p178 = pneg %p117
        %s179 = sand.u32 %s107, 1
        %s180 = scalar_lea.sflag [#allocation4], %s179
        %s181 = sand.u32 %s107, 1
        %s182 = scalar_lea.vmem [#allocation3], %s181
        %p183 = scmp.lt.s32.totalorder %s21, 1
        %s184 = scalar_select %p183, %s21, 1
        %p185 = scmp.lt.s32.totalorder %s22, 0
        %s186 = scalar_select %p185, %s22, 0
        %s187 = smul.addr %s184, 33
        %s188 = sadd.s32 %s186, %s187
        %s189 = smul.addr %s188, 8
        %s190 = scalar_lea.vmem %s0, %s189
        %p191 = scmp.eq.s32.totalorder %s22, 0
        // Predicated region
        $region33: #{tpu_custom_call.1} parent=31 // pred_check
          %p192 = pneg %p191
        $region34: #{tpu_custom_call.1} parent=31 // pred_check_branch
          %194 = sbr.rel (%p192) target = $region36
        $region35: #{tpu_custom_call.1} parent=31 // pred_region
          %195 = vst [vmem:[#allocation2] sm:$0xff] 0.0
          %196 = vst [vmem:[#allocation2 + $0x18] sm:$0xff] 0.0
          %197 = vst [vmem:[#allocation2 + $0x30] sm:$0xf] 0.0
          %vm198 = vcmask 1047680
          %199 = vst.msk [vmem:[#allocation2 + $0x8] sm:$0xff] %vm198, 0.0
          %vm200 = vcmask 130048
          %201 = vst.msk [vmem:[#allocation2 + $0x10] sm:$0xff] %vm200, 0.0
          %202 = vst.msk [vmem:[#allocation2 + $0x20] sm:$0xff] %vm198, 0.0
          %203 = vst.msk [vmem:[#allocation2 + $0x28] sm:$0xff] %vm200, 0.0
          %vm204 = vcmask 1043584
          %205 = vst.msk [vmem:[#allocation2 + $0x38] sm:$0xf] %vm204, 0.0
          %vm206 = vcmask 125952
          %207 = vst.msk [vmem:[#allocation2 + $0x40] sm:$0xf] %vm206, 0.0
        $region36: #{tpu_custom_call.1} parent=31 // pred_fallthru
          _
        %v208 = vld [vmem:[%s190] sm:$0xff]
        %v209 = vld [vmem:[%s190 + $0x8] sm:$0xff]
        %v210 = vld [vmem:[%s190 + $0x10] sm:$0xff]
        %v211 = vld [vmem:[%s190 + $0x18] sm:$0xff]
        %v212 = vld [vmem:[%s190 + $0x20] sm:$0xff]
        %v213 = vld [vmem:[%s190 + $0x28] sm:$0xff]
        %v214 = vld [vmem:[%s190 + $0x30] sm:$0xff]
        %v215 = vld [vmem:[%s190 + $0x38] sm:$0xff]
        %v216 = vld [vmem:[%s190 + $0x40] sm:$0xff]
        %v217 = vld [vmem:[%s190 + $0x48] sm:$0xff]
        %v218 = vld [vmem:[%s190 + $0x50] sm:$0xff]
        %v219 = vld [vmem:[%s190 + $0x58] sm:$0xff]
        %v220 = vld [vmem:[%s190 + $0x60] sm:$0xff]
        %v221 = vld [vmem:[%s190 + $0x68] sm:$0xff]
        %v222 = vld [vmem:[%s190 + $0x70] sm:$0xff]
        %v223 = vld [vmem:[%s190 + $0x78] sm:$0xff]
        %v224 = vld [vmem:[%s190 + $0x80] sm:$0xff]
        %v225 = vld [vmem:[%s190 + $0x88] sm:$0xff]
        %v226 = vld [vmem:[%s190 + $0x90] sm:$0xff]
        %v227 = vld [vmem:[%s190 + $0x98] sm:$0xff]
        %v228 = vld [vmem:[%s190 + $0xa0] sm:$0xff]
        %v229 = vld [vmem:[%s190 + $0xa8] sm:$0xff]
        %v230 = vld [vmem:[%s190 + $0xb0] sm:$0xff]
        %v231 = vld [vmem:[%s190 + $0xb8] sm:$0xff]
        %v232 = vld [vmem:[%s190 + $0xc0] sm:$0xff]
        %v233 = vld [vmem:[%s190 + $0xc8] sm:$0xff]
        %v234 = vld [vmem:[%s190 + $0xd0] sm:$0xff]
        %v235 = vld [vmem:[%s190 + $0xd8] sm:$0xff]
        %v236 = vld [vmem:[%s190 + $0xe0] sm:$0xff]
        %v237 = vld [vmem:[%s190 + $0xe8] sm:$0xff]
        %v238 = vld [vmem:[%s190 + $0xf0] sm:$0xff]
        %v239 = vld [vmem:[%s190 + $0xf8] sm:$0xff]
        %v240 = vld [vmem:[%s190 + $0x100] sm:$0x1]
        %v241 = vld [vmem:[%s1] sm:$0xff]
        %v242 = vld [vmem:[%s1 + $0x8] sm:$0xff]
        %v243 = vld [vmem:[%s1 + $0x10] sm:$0xff]
        %v244 = vld [vmem:[%s1 + $0x18] sm:$0xff]
        %v245 = vld [vmem:[%s1 + $0x20] sm:$0xff]
        %v246 = vld [vmem:[%s1 + $0x28] sm:$0xff]
        %v247 = vld [vmem:[%s1 + $0x30] sm:$0xf]
        %v248 = vld [vmem:[%s1 + $0x38] sm:$0xf]
        %v249 = vld [vmem:[%s1 + $0x40] sm:$0xf]
        %vm250 = vcmask 7168
        %v252 = vsel %vm250, %v243, 0
        %v255 = vsel %vm250, %v246, 0
        %v258 = vsel %vm250, %v249, 0
        %vm260 = vcmask 1040384
        %v262 = vsel %vm260, %v240, 0
        %264 = vmatprep.subr.mxu0 0.0
        %265 = vmatpush1.msra.mxu0 %v223
        %266 = vmatprep.subr.mxu0 0.0
        %267 = vmatpush1.msra.mxu0 %v222
        %268 = vmatprep.subr.mxu0 0.0
        %269 = vmatpush1.msra.mxu0 %v221
        %270 = vmatprep.subr.mxu0 0.0
        %271 = vmatpush1.msra.mxu0 %v220
        %272 = vmatprep.subr.mxu0 0.0
        %273 = vmatpush1.msra.mxu0 %v219
        %274 = vmatprep.subr.mxu0 0.0
        %275 = vmatpush1.msra.mxu0 %v218
        %276 = vmatprep.subr.mxu0 0.0
        %277 = vmatpush1.msra.mxu0 %v217
        %278 = vmatprep.subr.mxu0 0.0
        %279 = vmatpush1.msra.mxu0 %v216
        %280 = vmatprep.subr.mxu0 0.0
        %281 = vmatpush1.msra.mxu0 %v215
        %282 = vmatprep.subr.mxu0 0.0
        %283 = vmatpush1.msra.mxu0 %v214
        %284 = vmatprep.subr.mxu0 0.0
        %285 = vmatpush1.msra.mxu0 %v213
        %286 = vmatprep.subr.mxu0 0.0
        %287 = vmatpush1.msra.mxu0 %v212
        %288 = vmatprep.subr.mxu0 0.0
        %289 = vmatpush1.msra.mxu0 %v211
        %290 = vmatprep.subr.mxu0 0.0
        %291 = vmatpush1.msra.mxu0 %v210
        %292 = vmatprep.subr.mxu0 0.0
        %293 = vmatpush1.msra.mxu0 %v209
        %294 = vmatprep.subr.mxu0 0.0
        %295 = vmatpush1.msra.mxu0 %v208
        %296 = vmatprep.subr.mxu0 0.0
        %297 = vmatpush2.msra.mxu0 %v239
        %298 = vmatprep.subr.mxu0 0.0
        %299 = vmatpush2.msra.mxu0 %v238
        %300 = vmatprep.subr.mxu0 0.0
        %301 = vmatpush2.msra.mxu0 %v237
        %302 = vmatprep.subr.mxu0 0.0
        %303 = vmatpush2.msra.mxu0 %v236
        %304 = vmatprep.subr.mxu0 0.0
        %305 = vmatpush2.msra.mxu0 %v235
        %306 = vmatprep.subr.mxu0 0.0
        %307 = vmatpush2.msra.mxu0 %v234
        %308 = vmatprep.subr.mxu0 0.0
        %309 = vmatpush2.msra.mxu0 %v233
        %310 = vmatprep.subr.mxu0 0.0
        %311 = vmatpush2.msra.mxu0 %v232
        %312 = vmatprep.subr.mxu0 0.0
        %313 = vmatpush2.msra.mxu0 %v231
        %314 = vmatprep.subr.mxu0 0.0
        %315 = vmatpush2.msra.mxu0 %v230
        %316 = vmatprep.subr.mxu0 0.0
        %317 = vmatpush2.msra.mxu0 %v229
        %318 = vmatprep.subr.mxu0 0.0
        %319 = vmatpush2.msra.mxu0 %v228
        %320 = vmatprep.subr.mxu0 0.0
        %321 = vmatpush2.msra.mxu0 %v227
        %322 = vmatprep.subr.mxu0 0.0
        %323 = vmatpush2.msra.mxu0 %v226
        %324 = vmatprep.subr.mxu0 0.0
        %325 = vmatpush2.msra.mxu0 %v225
        %326 = vmatprep.subr.mxu0 0.0
        %327 = vmatpush2.msra.mxu0 %v224
        %328 = vmatprep.mubr.f32.mxu0 %v242
        %329 = vmatmul.mubr.f32.gmra.mxu0 %v241
        %v330 = vpop.f32.mrf.mxu0
        %v331 = vadd.f32 0.0, %v330
        %v332 = vpop.f32.mrf.mxu0
        %333 = vmatprep.mubr.f32.mxu0 %v245
        %334 = vmatmul.mubr.f32.gmra.mxu0 %v244
        %v335 = vpop.f32.mrf.mxu0
        %v336 = vadd.f32 0.0, %v335
        %v337 = vpop.f32.mrf.mxu0
        %338 = vmatprep.mubr.f32.mxu0 %v248
        %339 = vmatmul.mubr.f32.gmra.mxu0 %v247
        %v340 = vpop.f32.mrf.mxu0
        %v341 = vadd.f32 0.0, %v340
        %v342 = vpop.f32.mrf.mxu0
        %343 = vdwg.mxu0
        %344 = vmatprep.subr.mxu0 0.0
        %345 = vmatpush1.msra.mxu0 0.0
        %346 = vmatprep.subr.mxu0 0.0
        %347 = vmatpush1.msra.mxu0 0.0
        %348 = vmatprep.subr.mxu0 0.0
        %349 = vmatpush1.msra.mxu0 0.0
        %350 = vmatprep.subr.mxu0 0.0
        %351 = vmatpush1.msra.mxu0 0.0
        %352 = vmatprep.subr.mxu0 0.0
        %353 = vmatpush1.msra.mxu0 0.0
        %354 = vmatprep.subr.mxu0 0.0
        %355 = vmatpush1.msra.mxu0 0.0
        %356 = vmatprep.subr.mxu0 0.0
        %357 = vmatpush1.msra.mxu0 0.0
        %358 = vmatprep.subr.mxu0 0.0
        %359 = vmatpush1.msra.mxu0 0.0
        %360 = vmatprep.subr.mxu0 0.0
        %361 = vmatpush1.msra.mxu0 0.0
        %362 = vmatprep.subr.mxu0 0.0
        %363 = vmatpush1.msra.mxu0 0.0
        %364 = vmatprep.subr.mxu0 0.0
        %365 = vmatpush1.msra.mxu0 0.0
        %366 = vmatprep.subr.mxu0 0.0
        %367 = vmatpush1.msra.mxu0 0.0
        %368 = vmatprep.subr.mxu0 0.0
        %369 = vmatpush1.msra.mxu0 0.0
        %370 = vmatprep.subr.mxu0 0.0
        %371 = vmatpush1.msra.mxu0 0.0
        %372 = vmatprep.subr.mxu0 0.0
        %373 = vmatpush1.msra.mxu0 0.0
        %374 = vmatprep.subr.mxu0 0.0
        %375 = vmatpush1.msra.mxu0 %v262
        %376 = vmatprep.subr.mxu0 0.0
        %377 = vmatpush2.msra.mxu0 0.0
        %378 = vmatprep.subr.mxu0 0.0
        %379 = vmatpush2.msra.mxu0 0.0
        %380 = vmatprep.subr.mxu0 0.0
        %381 = vmatpush2.msra.mxu0 0.0
        %382 = vmatprep.subr.mxu0 0.0
        %383 = vmatpush2.msra.mxu0 0.0
        %384 = vmatprep.subr.mxu0 0.0
        %385 = vmatpush2.msra.mxu0 0.0
        %386 = vmatprep.subr.mxu0 0.0
        %387 = vmatpush2.msra.mxu0 0.0
        %388 = vmatprep.subr.mxu0 0.0
        %389 = vmatpush2.msra.mxu0 0.0
        %390 = vmatprep.subr.mxu0 0.0
        %391 = vmatpush2.msra.mxu0 0.0
        %392 = vmatprep.subr.mxu0 0.0
        %393 = vmatpush2.msra.mxu0 0.0
        %394 = vmatprep.subr.mxu0 0.0
        %395 = vmatpush2.msra.mxu0 0.0
        %396 = vmatprep.subr.mxu0 0.0
        %397 = vmatpush2.msra.mxu0 0.0
        %398 = vmatprep.subr.mxu0 0.0
        %399 = vmatpush2.msra.mxu0 0.0
        %400 = vmatprep.subr.mxu0 0.0
        %401 = vmatpush2.msra.mxu0 0.0
        %402 = vmatprep.subr.mxu0 0.0
        %403 = vmatpush2.msra.mxu0 0.0
        %404 = vmatprep.subr.mxu0 0.0
        %405 = vmatpush2.msra.mxu0 0.0
        %406 = vmatprep.subr.mxu0 0.0
        %407 = vmatpush2.msra.mxu0 0.0
        %408 = vmatprep.mubr.f32.mxu0 0.0
        %409 = vmatmul.mubr.f32.gmra.mxu0 %v252
        %v410 = vpop.f32.mrf.mxu0
        %v411 = vadd.f32 %v331, %v410
        %v412 = vpop.f32.mrf.mxu0
        %413 = vmatprep.mubr.f32.mxu0 0.0
        %414 = vmatmul.mubr.f32.gmra.mxu0 %v255
        %v415 = vpop.f32.mrf.mxu0
        %v416 = vadd.f32 %v336, %v415
        %v417 = vpop.f32.mrf.mxu0
        %418 = vmatprep.mubr.f32.mxu0 0.0
        %419 = vmatmul.mubr.f32.gmra.mxu0 %v258
        %v420 = vpop.f32.mrf.mxu0
        %v421 = vadd.f32 %v341, %v420
        %v422 = vpop.f32.mrf.mxu0
        %423 = vdwg.mxu0
        %vm424 = vcmask 130048
        %425 = vst.msk [vmem:[#allocation2 + $0x8] sm:$0xff] %vm424, %v411
        %426 = vst.msk [vmem:[#allocation2 + $0x20] sm:$0xff] %vm424, %v416
        %vm427 = vcmask 125952
        %428 = vst.msk [vmem:[#allocation2 + $0x38] sm:$0xf] %vm427, %v421
        // Predicated region
        $region37: #{tpu_custom_call.1} parent=31 // pred_check
          %p429 = pneg %p191
        $region38: #{tpu_custom_call.1} parent=31 // pred_check_branch
          %431 = sbr.rel (%p429) target = $region40
        $region39: #{tpu_custom_call.1} parent=31 // pred_region
          %v432 = vld [vmem:[%s2] sm:$0xf]
          %v433 = vld [vmem:[%s2] sm:$0x7]
          %v434 = vld [vmem:[%s2 + $0x4] sm:$0x7]
          %v435 = vld [vmem:[%s2 + $0x7] sm:$0x1]
          %v436 = vld [vmem:[#allocation2] sm:$0xf]
          %v437 = vld [vmem:[#allocation2 + $0x8] sm:$0xf]
          %439 = vset.pattern.permute.xlu0 0
          %440 = vperm.xlu0 %439, %v432
          %v441 = vpop.permute.xlu0 %440
          %v443 = vadd.f32 %v441, %v436
          %v444 = vadd.f32 %v441, %v437
          %v445 = vld [vmem:[#allocation2] sm:$0xf0]
          %v446 = vld [vmem:[#allocation2 + $0x8] sm:$0xf0]
          %v449 = vrot.slane %v445, 4
          %v450 = vrot.slane %v446, 4
          %451 = vrot.lane.b32.xlu0 %v449, 127
          %v452 = vpop.permute.xlu0 %451
          %453 = vrot.lane.b32.xlu0 %v450, 127
          %v454 = vpop.permute.xlu0 %453
          %vm455 = vcmask 1039360
          %v456 = vsel %vm455, %v452, %v454
          %v459 = vadd.f32 %v443, %v456
          %v460 = vadd.f32 %v444, %v454
          %v461 = vld [vmem:[#allocation2 + $0x20] sm:$0xf]
          %463 = vrot.lane.b32.xlu0 %v461, 126
          %v464 = vpop.permute.xlu0 %463
          %v466 = vadd.f32 %v459, %v464
          %v467 = vadd.f32 %v460, %v464
          %v468 = vld [vmem:[#allocation2 + $0x20] sm:$0xf0]
          %v470 = vrot.slane %v468, 4
          %471 = vrot.lane.b32.xlu0 %v470, 125
          %v472 = vpop.permute.xlu0 %471
          %v474 = vadd.f32 %v466, %v472
          %v475 = vadd.f32 %v467, %v472
          %v476 = vld [vmem:[#allocation2 + $0x38] sm:$0xf]
          %478 = vrot.lane.b32.xlu0 %v476, 124
          %v479 = vpop.permute.xlu0 %478
          %v481 = vadd.f32 %v474, %v479
          %v482 = vadd.f32 %v475, %v479
          %vm483 = vcmp.ge.f32.partialorder %v481, 0.0
          %vm484 = vcmp.ge.f32.partialorder %v482, 0.0
          %485 = vset.pattern.permute.xlu0 2
          %486 = vperm.xlu0 %485, %v432
          %v487 = vpop.permute.xlu0 %486
          %v489 = vmul.f32 %v487, %v481
          %v490 = vmul.f32 %v487, %v482
          %v491 = vsel %vm483, %v481, %v489
          %v492 = vsel %vm484, %v482, %v490
          %495 = vrot.lane.b32.xlu0 %v491, 2
          %v496 = vpop.permute.xlu0 %495
          %497 = vrot.lane.b32.xlu0 %v492, 2
          %v498 = vpop.permute.xlu0 %497
          %vm499 = vcmask 15360
          %v500 = vsel %vm499, %v496, %v498
          %v502 = vsel %vm427, %v500, 0.0
          %503 = vadd.xlane.f32.xlu0 %v502
          %v504 = vpop.xlane.xlu0 %503
          %v505 = vrot.slane %v504, 4
          %v506 = vadd.f32 %v504, %v505
          %v507 = vrot.slane %v506, 2
          %v508 = vadd.f32 %v506, %v507
          %v509 = vrot.slane %v508, 1
          %v510 = vadd.f32 %v508, %v509
          %s511 = vtos %v510
          %s512 = smul.f32 %s511, 0.015625
          %v513 = vstv %s512
          %v514 = vsub.f32 %v491, %v513
          %v515 = vsub.f32 %v492, %v513
          %v516 = vmul.f32 %v514, %v514
          %v517 = vmul.f32 %v515, %v515
          %520 = vrot.lane.b32.xlu0 %v516, 2
          %v521 = vpop.permute.xlu0 %520
          %522 = vrot.lane.b32.xlu0 %v517, 2
          %v523 = vpop.permute.xlu0 %522
          %v524 = vsel %vm499, %v521, %v523
          %v526 = vsel %vm427, %v524, 0.0
          %527 = vadd.xlane.f32.xlu0 %v526
          %v528 = vpop.xlane.xlu0 %527
          %v529 = vrot.slane %v528, 4
          %v530 = vadd.f32 %v528, %v529
          %v531 = vrot.slane %v530, 2
          %v532 = vadd.f32 %v530, %v531
          %v533 = vrot.slane %v532, 1
          %v534 = vadd.f32 %v532, %v533
          %s535 = vtos %v534
          %s536 = smul.f32 %s535, 0.015625
          %s537 = sadd.f32 %s536, 1e-08
          %v538 = vstv %s537
          %v539 = vrsqrt.pop %v538
          %s540 = vtos %v539
          %v541 = vstv %s540
          %v542 = vmul.f32 %v514, %v541
          %v543 = vmul.f32 %v515, %v541
          %545 = vset.pattern.permute.xlu0 1
          %546 = vperm.xlu0 %545, %v433
          %v547 = vpop.permute.xlu0 %546
          %551 = vrot.lane.b32.xlu0 %v542, 2
          %v552 = vpop.permute.xlu0 %551
          %553 = vrot.lane.b32.xlu0 %v543, 2
          %v554 = vpop.permute.xlu0 %553
          %v555 = vsel %vm499, %v552, %v554
          %vm556 = vcmask 31744
          %v558 = vsel %vm556, %v434, 0
          %vm560 = vcmask 1043456
          %v561 = vsel %vm560, %v555, 0
          %563 = vmatprep.subr.mxu0 0.0
          %564 = vmatpush1.msra.mxu0 0.0
          %565 = vmatprep.subr.mxu0 0.0
          %566 = vmatpush1.msra.mxu0 0.0
          %567 = vmatprep.subr.mxu0 0.0
          %568 = vmatpush1.msra.mxu0 0.0
          %569 = vmatprep.subr.mxu0 0.0
          %570 = vmatpush1.msra.mxu0 0.0
          %571 = vmatprep.subr.mxu0 0.0
          %572 = vmatpush1.msra.mxu0 0.0
          %573 = vmatprep.subr.mxu0 0.0
          %574 = vmatpush1.msra.mxu0 0.0
          %575 = vmatprep.subr.mxu0 0.0
          %576 = vmatpush1.msra.mxu0 0.0
          %577 = vmatprep.subr.mxu0 0.0
          %578 = vmatpush1.msra.mxu0 0.0
          %579 = vmatprep.subr.mxu0 0.0
          %580 = vmatpush1.msra.mxu0 0.0
          %581 = vmatprep.subr.mxu0 0.0
          %582 = vmatpush1.msra.mxu0 0.0
          %583 = vmatprep.subr.mxu0 0.0
          %584 = vmatpush1.msra.mxu0 0.0
          %585 = vmatprep.subr.mxu0 0.0
          %586 = vmatpush1.msra.mxu0 0.0
          %587 = vmatprep.subr.mxu0 0.0
          %588 = vmatpush1.msra.mxu0 0.0
          %589 = vmatprep.subr.mxu0 0.0
          %590 = vmatpush1.msra.mxu0 0.0
          %591 = vmatprep.subr.mxu0 0.0
          %592 = vmatpush1.msra.mxu0 0.0
          %593 = vmatprep.subr.mxu0 0.0
          %594 = vmatpush1.msra.mxu0 %v561
          %595 = vmatprep.subr.mxu0 0.0
          %596 = vmatpush2.msra.mxu0 0.0
          %597 = vmatprep.subr.mxu0 0.0
          %598 = vmatpush2.msra.mxu0 0.0
          %599 = vmatprep.subr.mxu0 0.0
          %600 = vmatpush2.msra.mxu0 0.0
          %601 = vmatprep.subr.mxu0 0.0
          %602 = vmatpush2.msra.mxu0 0.0
          %603 = vmatprep.subr.mxu0 0.0
          %604 = vmatpush2.msra.mxu0 0.0
          %605 = vmatprep.subr.mxu0 0.0
          %606 = vmatpush2.msra.mxu0 0.0
          %607 = vmatprep.subr.mxu0 0.0
          %608 = vmatpush2.msra.mxu0 0.0
          %609 = vmatprep.subr.mxu0 0.0
          %610 = vmatpush2.msra.mxu0 0.0
          %611 = vmatprep.subr.mxu0 0.0
          %612 = vmatpush2.msra.mxu0 0.0
          %613 = vmatprep.subr.mxu0 0.0
          %614 = vmatpush2.msra.mxu0 0.0
          %615 = vmatprep.subr.mxu0 0.0
          %616 = vmatpush2.msra.mxu0 0.0
          %617 = vmatprep.subr.mxu0 0.0
          %618 = vmatpush2.msra.mxu0 0.0
          %619 = vmatprep.subr.mxu0 0.0
          %620 = vmatpush2.msra.mxu0 0.0
          %621 = vmatprep.subr.mxu0 0.0
          %622 = vmatpush2.msra.mxu0 0.0
          %623 = vmatprep.subr.mxu0 0.0
          %624 = vmatpush2.msra.mxu0 0.0
          %625 = vmatprep.subr.mxu0 0.0
          %626 = vmatpush2.msra.mxu0 0.0
          %627 = vmatprep.mubr.f32.mxu0 0.0
          %628 = vmatmul.mubr.f32.gmra.mxu0 %v558
          %v629 = vpop.f32.mrf.mxu0
          %v630 = vadd.f32 %v547, %v629
          %v631 = vpop.f32.mrf.mxu0
          %632 = vdwg.mxu0
          %vm633 = vcmask 124928
          %634 = vst.msk [vmem:[#allocation2 + $0x8] sm:$0x7] %vm633, %v630
          %v635 = vld [vmem:[#allocation2] ss:$0 sm:$0xff]
          %v636 = vld [vmem:[#allocation2 + $0x8] ss:$0 sm:$0xff]
          %638 = vset.pattern.permute.xlu0 0
          %639 = vperm.xlu0 %638, %v435
          %v640 = vpop.permute.xlu0 %639
          %v642 = vadd.f32 %v640, %v635
          %v643 = vadd.f32 %v640, %v636
          %v644 = vld [vmem:[#allocation2 + $0x9] ss:$0 sm:$0xff]
          %646 = vrot.lane.b32.xlu0 %v644, 127
          %v647 = vpop.permute.xlu0 %646
          %v649 = vadd.f32 %v642, %v647
          %v650 = vadd.f32 %v643, %v647
          %v651 = vld [vmem:[#allocation2 + $0xa] ss:$0 sm:$0xff]
          %653 = vrot.lane.b32.xlu0 %v651, 126
          %v654 = vpop.permute.xlu0 %653
          %v656 = vadd.f32 %v649, %v654
          %v657 = vadd.f32 %v650, %v654
          %v658 = vxor.u32 %v656, 2147483648
          %v659 = vxor.u32 %v657, 2147483648
          %v660 = vmul.f32 %v658, 1.442695
          %v661 = vpow.pop %v660
          %v662 = vmul.f32 %v659, 1.442695
          %v663 = vpow.pop %v662
          %v664 = vadd.f32 %v661, 1.0
          %v665 = vadd.f32 %v663, 1.0
          %v666 = vrcp.pop %v664
          %v667 = vmul.f32 1.0, %v666
          %v668 = vrcp.pop %v665
          %v669 = vmul.f32 1.0, %v668
          %672 = vrot.lane.b32.xlu0 %v667, 1
          %v673 = vpop.permute.xlu0 %672
          %674 = vrot.lane.b32.xlu0 %v669, 1
          %v675 = vpop.permute.xlu0 %674
          %v676 = vsel %vm250, %v673, %v675
          %vm678 = vcmask 122880
          %679 = vst.msk [vmem:[%s182] sm:$0x1] %vm678, %v676
        $region40: #{tpu_custom_call.1} parent=31 // pred_fallthru
          _
        %s680 = sand.u32 %s107, 1
        %s681 = scalar_lea.sflag [#allocation4], %s680
        %s682 = sand.u32 %s107, 1
        %s683 = scalar_lea.vmem [#allocation3], %s682
        // Predicated region
        $region41: #{tpu_custom_call.1} parent=31 // pred_check
          %p684 = pneg %p117
        $region42: #{tpu_custom_call.1} parent=31 // pred_check_branch
          %686 = sbr.rel (%p684) target = $region44
        $region43: #{tpu_custom_call.1} parent=31 // pred_region
          %s688 = ssub.s32 16, 16
          %689 = vsyncadd %s681, %s688
          %s690 = smul.addr %s21, 16
          %s691 = scalar_lea.hbm %s3, %s690
          %s693 = sshll.u32 %s683, 4
          %s694 = int_to_ptr.vmem [resolvable:$true] %s693
          %696 = dma.vmem_to_hbm [thread:$0]  %s694, 16, %s691, %s681
        $region44: #{tpu_custom_call.1} parent=31 // pred_fallthru
          _
      $region32: #{tpu_custom_call.1} parent=5 // pred_fallthru
        _
      %p697 = scmp.le.s32.totalorder 2, %s12
      // Predicated region
      $region45: #{tpu_custom_call.1} parent=5 // pred_check
        %p698 = pneg %p697
      $region46: #{tpu_custom_call.1} parent=5 // pred_check_branch
        %700 = sbr.rel (%p698) target = $region48
      $region47: #{tpu_custom_call.1} parent=5 // pred_region
        %s701 = ssub.s32 %s12, 2
        // Predicated region
        $region49: #{tpu_custom_call.1} parent=47 // pred_check
          %p702 = pneg %p123
        $region50: #{tpu_custom_call.1} parent=47 // pred_check_branch
          %704 = sbr.rel (%p702) target = $region52
        $region51: #{tpu_custom_call.1} parent=47 // pred_region
          %s705 = sand.u32 %s108, 1
          %s706 = scalar_lea.sflag [#allocation4], %s705
          %s707 = sand.u32 %s108, 1
          %s708 = scalar_lea.vmem [#allocation3], %s707
          %709 = dma.done %s706, 16
        $region52: #{tpu_custom_call.1} parent=47 // pred_fallthru
          _
      $region48: #{tpu_custom_call.1} parent=5 // pred_fallthru
        _
    $region6: #{tpu_custom_call.1} parent=1 // loop_footer
      %s16 = sadd.s32 1, %s12
    $region7: #{tpu_custom_call.1} parent=1 // loop_footer_branch
      %11 = sbr.rel target = $region3
    $region8: #{tpu_custom_call.1} parent=1 // loop_exit
      _
    %710 = vsyncpa [#allocation4], 1
    %s711 = scalar_lea.sflag [#allocation4], 1
    %712 = vsyncpa %s711, 1

</llo_original>
